<compile_context>
chip_gen: v5e
topology: v5e:2x2
jax: 0.10.0
libtpu: 0.0.40
codegen_flags: <defaults>
</compile_context>

<pallas_src>
import functools

import numpy as np
import jax
import jax.numpy as jnp
from jax.experimental import pallas as pl
from jax.experimental.pallas import tpu as pltpu


def _round_up(x, m):
    return ((x + m - 1) // m) * m


def _pad_to(x, shape):
    return jnp.pad(x, [(0, t - s) for s, t in zip(x.shape, shape)])


def _cross_attention_kernel(
    q_ref, kv_ref, mask_ref,
    wq_ref, bq_ref, wkv_ref, bkv_ref, wo_ref, bo_ref,
    out_ref, scores_ref,
    *, dk_p, compute_dtype,
):
    cdt = compute_dtype

    # ---- projections: batch folded into M, K/V fused into one MXU pass ----
    q_all = (jnp.dot(q_ref[...], wq_ref[...],
                     preferred_element_type=jnp.float32) + bq_ref[...])
    kv_all = (jnp.dot(kv_ref[...], wkv_ref[...],
                      preferred_element_type=jnp.float32) + bkv_ref[...])
    k_all = kv_all[:, :dk_p]          # lane-tile-aligned slices (dk_p % 128 == 0)
    v_all = kv_all[:, dk_p:]

    # ---- scores: ONE (B*Lq, dk) x (dk, B*Lkv) matmul.  1/sqrt(d_k) is already
    # folded into wq/bq; contraction is over the last dims (no materialized .T).
    scores_full = jnp.einsum("md,nd->mn", q_all.astype(cdt), k_all.astype(cdt),
                             preferred_element_type=jnp.float32)
    # Pre-softmax scores are a module output; the wrapper extracts the per-batch
    # diagonal blocks from this small folded slab.
    scores_ref[...] = scores_full.astype(scores_ref.dtype)

    # ---- softmax over the block diagonal (f32).  Off-diagonal entries get a
    # -1e30 additive mask, so their exp underflows to exact f32 zeros and the
    # batch-folded attn@V below stays exact.
    s = scores_full + mask_ref[...]
    m = jnp.max(s, axis=-1, keepdims=True)
    e = jnp.exp(s - m)
    weights = e / jnp.sum(e, axis=-1, keepdims=True)   # exact divide (cheap here)

    # ---- attention output + final projection (batch-folded 2-D matmuls) ----
    attn = jnp.dot(weights.astype(cdt), v_all.astype(cdt),
                   preferred_element_type=jnp.float32)
    out = (jnp.dot(attn.astype(cdt), wo_ref[...],
                   preferred_element_type=jnp.float32) + bo_ref[...])
    out_ref[...] = out.astype(out_ref.dtype)           # lane-dense (Dq_p) store


def prepare_params(params, d_k, compute_dtype=jnp.bfloat16):
    """One-time weight preparation (hoisted off the per-call path):
    pad to lane tiles, pack K/V projections, fold 1/sqrt(d_k) into the query
    projection, and cast MXU operands to `compute_dtype` (biases stay f32)."""
    d_model_q = params["wq"].shape[0]
    d_model_kv = params["wk"].shape[0]
    dk_p = _round_up(d_k, 128)
    dq_p = _round_up(d_model_q, 128)
    scale = 1.0 / (d_k ** 0.5)

    wq = _pad_to(params["wq"] * scale, (d_model_q, dk_p)).astype(compute_dtype)
    bq = _pad_to(params["bq"] * scale, (1, dk_p))                    # f32 VPU add
    wkv = jnp.concatenate(
        [_pad_to(params["wk"], (d_model_kv, dk_p)),
         _pad_to(params["wv"], (d_model_kv, dk_p))], axis=1).astype(compute_dtype)
    bkv = jnp.concatenate(
        [_pad_to(params["bk"], (1, dk_p)),
         _pad_to(params["bv"], (1, dk_p))], axis=1)
    wo = _pad_to(params["wo"], (dk_p, dq_p)).astype(compute_dtype)
    bo = _pad_to(params["bo"], (1, dq_p))
    return {"wq": wq, "bq": bq, "wkv": wkv, "bkv": bkv, "wo": wo, "bo": bo}


@jax.jit
def cross_attention(Q, KV, prepared):
    """Q: (B, Lq, Dq), KV: (B, Lkv, Dkv). Returns (output, attention_scores)."""
    B, Lq, Dq = Q.shape
    _, Lkv, Dkv = KV.shape
    dk_p = prepared["wq"].shape[1]
    Dq_p = prepared["wo"].shape[1]
    cdt = prepared["wq"].dtype
    Lq_p = _round_up(Lq, 8)

    # Per-call activation plumbing only: fold batch into M, cast MXU operands.
    if Lq_p != Lq:
        Q = jnp.pad(Q, ((0, 0), (0, Lq_p - Lq), (0, 0)))
    q_flat = Q.reshape(B * Lq_p, Dq).astype(cdt)
    kv_flat = KV.reshape(B * Lkv, Dkv).astype(cdt)    # true Lkv: no seq padding

    # Block-diagonal additive mask is a trace-time constant (numpy -> literal).
    rb = np.repeat(np.arange(B), Lq_p)
    cb = np.repeat(np.arange(B), Lkv)
    mask = jnp.asarray(
        np.where(rb[:, None] == cb[None, :], 0.0, -1e30).astype(np.float32))

    kernel = functools.partial(
        _cross_attention_kernel, dk_p=dk_p, compute_dtype=cdt)

    def full2d(shape):
        return pl.BlockSpec(shape, lambda i: (0, 0))

    operands = (q_flat, kv_flat, mask, prepared["wq"], prepared["bq"],
                prepared["wkv"], prepared["bkv"], prepared["wo"], prepared["bo"])

    grid_spec = pltpu.PrefetchScalarGridSpec(
        num_scalar_prefetch=0,
        grid=(1,),   # whole (small) problem in one step; see scaling notes above
        in_specs=[full2d(x.shape) for x in operands],
        out_specs=[full2d((B * Lq_p, Dq_p)), full2d((B * Lq_p, B * Lkv))],
    )

    out_flat, scores_flat = pl.pallas_call(
        kernel,
        grid_spec=grid_spec,
        out_shape=(jax.ShapeDtypeStruct((B * Lq_p, Dq_p), jnp.float32),
                   jax.ShapeDtypeStruct((B * Lq_p, B * Lkv), jnp.float32)),
        compiler_params=pltpu.CompilerParams(
            dimension_semantics=("arbitrary",)),
    )(*operands)

    out = out_flat.reshape(B, Lq_p, Dq_p)[:, :Lq, :Dq]
    # Extract the per-batch diagonal blocks of the folded score slab.
    sf = scores_flat.reshape(B, Lq_p, B, Lkv)
    scores = sf[jnp.arange(B), :, jnp.arange(B), :][:, :Lq, :]
    return out, scores


def init_params(key, d_model_q, d_model_kv, d_k):
    """Deterministic synthetic parameters (PyTorch-Linear-like uniform init),
    stored as (in_features, out_features) so the kernel does x @ W + b."""
    ks = jax.random.split(key, 8)

    def linear(kw, kb, fan_in, fan_out):
        bound = 1.0 / (fan_in ** 0.5)
        w = jax.random.uniform(kw, (fan_in, fan_out), jnp.float32, -bound, bound)
        b = jax.random.uniform(kb, (1, fan_out), jnp.float32, -bound, bound)
        return w, b

    wq, bq = linear(ks[0], ks[1], d_model_q, d_k)
    wk, bk = linear(ks[2], ks[3], d_model_kv, d_k)
    wv, bv = linear(ks[4], ks[5], d_model_kv, d_k)
    wo, bo = linear(ks[6], ks[7], d_k, d_model_q)
    return {"wq": wq, "bq": bq, "wk": wk, "bk": bk,
            "wv": wv, "bv": bv, "wo": wo, "bo": bo}


def reference(Q, KV, params, d_k):
    qp = Q @ params["wq"] + params["bq"]
    kp = KV @ params["wk"] + params["bk"]
    vp = KV @ params["wv"] + params["bv"]
    scores = jnp.einsum("bqd,bkd->bqk", qp, kp) / (d_k ** 0.5)
    w = jax.nn.softmax(scores, axis=-1)
    out = jnp.einsum("bqk,bkd->bqd", w, vp) @ params["wo"] + params["bo"]
    return out, scores


if __name__ == "__main__":
    # Small shapes consistent with the module's forward.
    B, Lq, Lkv = 2, 8, 8
    d_model_q, d_model_kv, d_k = 32, 48, 16

    key = jax.random.PRNGKey(0)
    k_q, k_kv, k_p = jax.random.split(key, 3)

    Q = jax.random.normal(k_q, (B, Lq, d_model_q), jnp.float32)
    KV = jax.random.normal(k_kv, (B, Lkv, d_model_kv), jnp.float32)
    params = init_params(k_p, d_model_q, d_model_kv, d_k)
    ref_out, ref_scores = reference(Q, KV, params, d_k)

    # f32 MXU-operand path: near-exact agreement (exact softmax divide).
    prep_f32 = prepare_params(params, d_k, compute_dtype=jnp.float32)
    out32, sc32 = cross_attention(Q, KV, prep_f32)
    out32 = jax.block_until_ready(out32)
    sc32 = jax.block_until_ready(sc32)
    assert jnp.allclose(sc32, ref_scores, atol=2e-5, rtol=2e-5)
    assert jnp.allclose(out32, ref_out, atol=1e-4, rtol=1e-4)

    # bf16 MXU-operand path (perf default per review): accumulation and softmax
    # stay f32; tolerance reflects bf16 operand rounding only.
    prep_bf16 = prepare_params(params, d_k)          # compute_dtype=bf16
    out16, sc16 = cross_attention(Q, KV, prep_bf16)
    out16 = jax.block_until_ready(out16)
    sc16 = jax.block_until_ready(sc16)
    assert jnp.allclose(sc16, ref_scores, atol=2e-2, rtol=2e-2)
    assert jnp.allclose(out16, ref_out, atol=5e-2, rtol=5e-2)

    print("KERNEL_OK")
</pallas_src>

<mosaic_0001>
module attributes {stable_mosaic.version = 11 : i64} {
  func.func @_cross_attention_kernel(%arg0: i32, %arg1: memref<16x32xf32, #tpu.memory_space<vmem>>, %arg2: memref<16x48xf32, #tpu.memory_space<vmem>>, %arg3: memref<16x16xf32, #tpu.memory_space<vmem>>, %arg4: memref<32x128xf32, #tpu.memory_space<vmem>>, %arg5: memref<1x128xf32, #tpu.memory_space<vmem>>, %arg6: memref<48x256xf32, #tpu.memory_space<vmem>>, %arg7: memref<1x256xf32, #tpu.memory_space<vmem>>, %arg8: memref<128x128xf32, #tpu.memory_space<vmem>>, %arg9: memref<1x128xf32, #tpu.memory_space<vmem>>, %arg10: memref<16x128xf32, #tpu.memory_space<vmem>>, %arg11: memref<16x16xf32, #tpu.memory_space<vmem>>) attributes {dimension_semantics = [#tpu.dimension_semantics<arbitrary>], iteration_bounds = array<i64: 1>, scalar_prefetch = 0 : i64, scratch_operands = 0 : i64, tpu.core_type = #tpu.core_type<tc>, window_params = [{pipeline_mode = #tpu.pipeline_mode<synchronous>, transform_indices = @transform_0, window_bounds = array<i64: 16, 32>}, {pipeline_mode = #tpu.pipeline_mode<synchronous>, transform_indices = @transform_1, window_bounds = array<i64: 16, 48>}, {pipeline_mode = #tpu.pipeline_mode<synchronous>, transform_indices = @transform_2, window_bounds = array<i64: 16, 16>}, {pipeline_mode = #tpu.pipeline_mode<synchronous>, transform_indices = @transform_3, window_bounds = array<i64: 32, 128>}, {pipeline_mode = #tpu.pipeline_mode<synchronous>, transform_indices = @transform_4, window_bounds = array<i64: 1, 128>}, {pipeline_mode = #tpu.pipeline_mode<synchronous>, transform_indices = @transform_5, window_bounds = array<i64: 48, 256>}, {pipeline_mode = #tpu.pipeline_mode<synchronous>, transform_indices = @transform_6, window_bounds = array<i64: 1, 256>}, {pipeline_mode = #tpu.pipeline_mode<synchronous>, transform_indices = @transform_7, window_bounds = array<i64: 128, 128>}, {pipeline_mode = #tpu.pipeline_mode<synchronous>, transform_indices = @transform_8, window_bounds = array<i64: 1, 128>}, {pipeline_mode = #tpu.pipeline_mode<synchronous>, transform_indices = @transform_9, window_bounds = array<i64: 16, 128>}, {pipeline_mode = #tpu.pipeline_mode<synchronous>, transform_indices = @transform_10, window_bounds = array<i64: 16, 16>}]} {
    %c0 = arith.constant 0 : index
    %c0_0 = arith.constant 0 : index
    %0 = vector.load %arg1[%c0, %c0_0] : memref<16x32xf32, #tpu.memory_space<vmem>>, vector<16x32xf32>
    %c0_1 = arith.constant 0 : index
    %c0_2 = arith.constant 0 : index
    %1 = vector.load %arg4[%c0_1, %c0_2] : memref<32x128xf32, #tpu.memory_space<vmem>>, vector<32x128xf32>
    %cst = arith.constant dense<0.000000e+00> : vector<16x128xf32>
    %2 = tpu.matmul %0, %1, %cst {dimension_numbers = #tpu.dot_dimension_numbers<[1], [0], [0], [1], [0, 0, 1, 1], [], []>} : vector<16x32xf32>, vector<32x128xf32>, vector<16x128xf32> -> vector<16x128xf32>
    %c0_3 = arith.constant 0 : index
    %c0_4 = arith.constant 0 : index
    %3 = vector.load %arg5[%c0_3, %c0_4] : memref<1x128xf32, #tpu.memory_space<vmem>>, vector<1x128xf32>
    %4 = vector.broadcast %3 : vector<1x128xf32> to vector<16x128xf32>
    %5 = arith.addf %2, %4 : vector<16x128xf32>
    %c0_5 = arith.constant 0 : index
    %c0_6 = arith.constant 0 : index
    %6 = vector.load %arg2[%c0_5, %c0_6] : memref<16x48xf32, #tpu.memory_space<vmem>>, vector<16x48xf32>
    %c0_7 = arith.constant 0 : index
    %c0_8 = arith.constant 0 : index
    %7 = vector.load %arg6[%c0_7, %c0_8] : memref<48x256xf32, #tpu.memory_space<vmem>>, vector<48x256xf32>
    %cst_9 = arith.constant dense<0.000000e+00> : vector<16x256xf32>
    %8 = tpu.matmul %6, %7, %cst_9 {dimension_numbers = #tpu.dot_dimension_numbers<[1], [0], [0], [1], [0, 0, 1, 1], [], []>} : vector<16x48xf32>, vector<48x256xf32>, vector<16x256xf32> -> vector<16x256xf32>
    %c0_10 = arith.constant 0 : index
    %c0_11 = arith.constant 0 : index
    %9 = vector.load %arg7[%c0_10, %c0_11] : memref<1x256xf32, #tpu.memory_space<vmem>>, vector<1x256xf32>
    %10 = vector.broadcast %9 : vector<1x256xf32> to vector<16x256xf32>
    %11 = arith.addf %8, %10 : vector<16x256xf32>
    %12 = vector.extract_strided_slice %11 {offsets = [0, 0], sizes = [16, 128], strides = [1, 1]} : vector<16x256xf32> to vector<16x128xf32>
    %13 = vector.extract_strided_slice %11 {offsets = [0, 128], sizes = [16, 128], strides = [1, 1]} : vector<16x256xf32> to vector<16x128xf32>
    "tpu.trace_start"() <{level = 10 : i32, message = "md,nd->mn"}> : () -> ()
    %cst_12 = arith.constant dense<0.000000e+00> : vector<16x16xf32>
    %14 = tpu.matmul %5, %12, %cst_12 {dimension_numbers = #tpu.dot_dimension_numbers<[1], [1], [0], [0], [0, 0, 1, 0], [], []>} : vector<16x128xf32>, vector<16x128xf32>, vector<16x16xf32> -> vector<16x16xf32>
    "tpu.trace_stop"() : () -> ()
    %c0_13 = arith.constant 0 : index
    %c0_14 = arith.constant 0 : index
    %15 = vector.load %arg11[%c0_13, %c0_14] : memref<16x16xf32, #tpu.memory_space<vmem>>, vector<16x16xf32>
    tpu.vector_store %arg11[%c0_13, %c0_14], %14 {strides = array<i32>} : memref<16x16xf32, #tpu.memory_space<vmem>>, vector<16x16xf32>,
    %c0_15 = arith.constant 0 : index
    %c0_16 = arith.constant 0 : index
    %16 = vector.load %arg3[%c0_15, %c0_16] : memref<16x16xf32, #tpu.memory_space<vmem>>, vector<16x16xf32>
    %17 = arith.addf %14, %16 : vector<16x16xf32>
    %cst_17 = arith.constant dense<0xFF800000> : vector<16xf32>
    %18 = vector.multi_reduction <maximumf>, %17, %cst_17 [1] : vector<16x16xf32> to vector<16xf32>
    %19 = vector.shape_cast %18 : vector<16xf32> to vector<16x1xf32>
    %20 = vector.broadcast %19 : vector<16x1xf32> to vector<16x16xf32>
    %21 = arith.subf %17, %20 : vector<16x16xf32>
    %22 = math.exp %21 : vector<16x16xf32>
    %cst_18 = arith.constant dense<0.000000e+00> : vector<16xf32>
    %23 = vector.multi_reduction <add>, %22, %cst_18 [1] : vector<16x16xf32> to vector<16xf32>
    %24 = vector.shape_cast %23 : vector<16xf32> to vector<16x1xf32>
    %25 = vector.broadcast %24 : vector<16x1xf32> to vector<16x16xf32>
    %26 = arith.divf %22, %25 : vector<16x16xf32>
    %cst_19 = arith.constant dense<0.000000e+00> : vector<16x128xf32>
    %27 = tpu.matmul %26, %13, %cst_19 {dimension_numbers = #tpu.dot_dimension_numbers<[1], [0], [0], [1], [0, 0, 1, 1], [], []>} : vector<16x16xf32>, vector<16x128xf32>, vector<16x128xf32> -> vector<16x128xf32>
    %c0_20 = arith.constant 0 : index
    %c0_21 = arith.constant 0 : index
    %28 = vector.load %arg8[%c0_20, %c0_21] : memref<128x128xf32, #tpu.memory_space<vmem>>, vector<128x128xf32>
    %cst_22 = arith.constant dense<0.000000e+00> : vector<16x128xf32>
    %29 = tpu.matmul %27, %28, %cst_22 {dimension_numbers = #tpu.dot_dimension_numbers<[1], [0], [0], [1], [0, 0, 1, 1], [], []>} : vector<16x128xf32>, vector<128x128xf32>, vector<16x128xf32> -> vector<16x128xf32>
    %c0_23 = arith.constant 0 : index
    %c0_24 = arith.constant 0 : index
    %30 = vector.load %arg9[%c0_23, %c0_24] : memref<1x128xf32, #tpu.memory_space<vmem>>, vector<1x128xf32>
    %31 = vector.broadcast %30 : vector<1x128xf32> to vector<16x128xf32>
    %32 = arith.addf %29, %31 : vector<16x128xf32>
    %c0_25 = arith.constant 0 : index
    %c0_26 = arith.constant 0 : index
    %33 = vector.load %arg10[%c0_25, %c0_26] : memref<16x128xf32, #tpu.memory_space<vmem>>, vector<16x128xf32>
    tpu.vector_store %arg10[%c0_25, %c0_26], %32 {strides = array<i32>} : memref<16x128xf32, #tpu.memory_space<vmem>>, vector<16x128xf32>,
    return
  }
  func.func @transform_0(%arg0: i32) -> (i32, i32) {
    %c0_i32 = arith.constant 0 : i32
    %c0_i32_0 = arith.constant 0 : i32
    %c0_i32_1 = arith.constant 0 : i32
    return %c0_i32, %c0_i32_0 : i32, i32
  }
  func.func @transform_1(%arg0: i32) -> (i32, i32) {
    %c0_i32 = arith.constant 0 : i32
    %c0_i32_0 = arith.constant 0 : i32
    %c0_i32_1 = arith.constant 0 : i32
    return %c0_i32, %c0_i32_0 : i32, i32
  }
  func.func @transform_2(%arg0: i32) -> (i32, i32) {
    %c0_i32 = arith.constant 0 : i32
    %c0_i32_0 = arith.constant 0 : i32
    %c0_i32_1 = arith.constant 0 : i32
    return %c0_i32, %c0_i32_0 : i32, i32
  }
  func.func @transform_3(%arg0: i32) -> (i32, i32) {
    %c0_i32 = arith.constant 0 : i32
    %c0_i32_0 = arith.constant 0 : i32
    %c0_i32_1 = arith.constant 0 : i32
    return %c0_i32, %c0_i32_0 : i32, i32
  }
  func.func @transform_4(%arg0: i32) -> (i32, i32) {
    %c0_i32 = arith.constant 0 : i32
    %c0_i32_0 = arith.constant 0 : i32
    %c0_i32_1 = arith.constant 0 : i32
    return %c0_i32, %c0_i32_0 : i32, i32
  }
  func.func @transform_5(%arg0: i32) -> (i32, i32) {
    %c0_i32 = arith.constant 0 : i32
    %c0_i32_0 = arith.constant 0 : i32
    %c0_i32_1 = arith.constant 0 : i32
    return %c0_i32, %c0_i32_0 : i32, i32
  }
  func.func @transform_6(%arg0: i32) -> (i32, i32) {
    %c0_i32 = arith.constant 0 : i32
    %c0_i32_0 = arith.constant 0 : i32
    %c0_i32_1 = arith.constant 0 : i32
    return %c0_i32, %c0_i32_0 : i32, i32
  }
  func.func @transform_7(%arg0: i32) -> (i32, i32) {
    %c0_i32 = arith.constant 0 : i32
    %c0_i32_0 = arith.constant 0 : i32
    %c0_i32_1 = arith.constant 0 : i32
    return %c0_i32, %c0_i32_0 : i32, i32
  }
  func.func @transform_8(%arg0: i32) -> (i32, i32) {
    %c0_i32 = arith.constant 0 : i32
    %c0_i32_0 = arith.constant 0 : i32
    %c0_i32_1 = arith.constant 0 : i32
    return %c0_i32, %c0_i32_0 : i32, i32
  }
  func.func @transform_9(%arg0: i32) -> (i32, i32) {
    %c0_i32 = arith.constant 0 : i32
    %c0_i32_0 = arith.constant 0 : i32
    %c0_i32_1 = arith.constant 0 : i32
    return %c0_i32, %c0_i32_0 : i32, i32
  }
  func.func @transform_10(%arg0: i32) -> (i32, i32) {
    %c0_i32 = arith.constant 0 : i32
    %c0_i32_0 = arith.constant 0 : i32
    %c0_i32_1 = arith.constant 0 : i32
    return %c0_i32, %c0_i32_0 : i32, i32
  }
}

</mosaic_0001>

<llo_original>
// kernel: cross_attention.1
$region0: #{cross_attention.1}
  #allocation0 [shape = 'u32[]', space=smem, size = 0x4, offset = 0x4, fixed_abs, tag = 'smem constant byte address 0x4 - core index']
  #allocation1 [shape = 'u32[72,128]{1,0:T(1,128)}', space=vmem, size = 0x9000, scoped, tag = 'internal scratch']
  %s0 = inlined_call_operand.hbm [shape: f32[16,32], index: 0, kind: input, shape index: {}]
  %s1 = inlined_call_operand.hbm [shape: f32[16,48], index: 1, kind: input, shape index: {}]
  %s2 = inlined_call_operand.hbm [shape: f32[16,16], index: 2, kind: input, shape index: {}]
  %s3 = inlined_call_operand.hbm [shape: f32[32,128], index: 3, kind: input, shape index: {}]
  %s4 = inlined_call_operand.vmem [shape: f32[1,128], index: 4, kind: input, shape index: {}]
  %s5 = inlined_call_operand.hbm [shape: f32[48,256], index: 5, kind: input, shape index: {}]
  %s6 = inlined_call_operand.vmem [shape: f32[1,256], index: 6, kind: input, shape index: {}]
  %s7 = inlined_call_operand.hbm [shape: f32[128,128], index: 7, kind: input, shape index: {}]
  %s8 = inlined_call_operand.hbm [shape: f32[1,128], index: 8, kind: input, shape index: {}]
  %s9 = inlined_call_operand.hbm [shape: f32[16,128], index: 9, kind: output, shape index: {0}]
  %s10 = inlined_call_operand.vmem [shape: f32[16,16], index: 10, kind: output, shape index: {1}]
  %11 = xla_tuple %s9, %s10
  %s12 = sld [smem:[#allocation0]]
  $region82: #{cross_attention.1} parent=0
    _
  %s14 = ssub.s32 1, %s12
  %s15 = scalar_select 0, %s14, %s12
  $region1: #{cross_attention.1} parent=0
    #allocation2 [shape = 'u8[8192]{0}', space=vmem, size = 0x2000, scoped, tag = 'input window, operand 0, single buffered']
    #allocation3 [shape = 's32[1]{0}', space=sflag, size = 0x4, scoped, tag = 'scoped memory for cross_attention.1']
    #allocation4 [shape = 's32[1]{0}', space=sflag, size = 0x4, scoped, tag = 'scoped memory for cross_attention.1']
    #allocation5 [shape = 'u8[8192]{0}', space=vmem, size = 0x2000, scoped, tag = 'input window, operand 1, single buffered']
    #allocation6 [shape = 's32[1]{0}', space=sflag, size = 0x4, scoped, tag = 'scoped memory for cross_attention.1']
    #allocation7 [shape = 'u8[8192]{0}', space=vmem, size = 0x2000, scoped, tag = 'input window, operand 2, single buffered']
    #allocation8 [shape = 'u8[16384]{0}', space=vmem, size = 0x4000, scoped, tag = 'input window, operand 3, single buffered']
    #allocation9 [shape = 's32[1]{0}', space=sflag, size = 0x4, scoped, tag = 'scoped memory for cross_attention.1']
    #allocation10 [shape = 'u8[49152]{0}', space=vmem, size = 0xc000, scoped, tag = 'input window, operand 5, single buffered']
    #allocation11 [shape = 'u8[65536]{0}', space=vmem, size = 0x10000, scoped, tag = 'input window, operand 7, single buffered']
    #allocation12 [shape = 's32[1]{0}', space=sflag, size = 0x4, scoped, tag = 'scoped memory for cross_attention.1']
    #allocation13 [shape = 'u8[512]{0}', space=vmem, size = 0x400, scoped, tag = 'input window, operand 8, single buffered']
    #allocation14 [shape = 'u8[8192]{0}', space=vmem, size = 0x2000, scoped, tag = 'output window, operand 0, single buffered']
    %16 = vsyncpa [#allocation3], 0
    %17 = vsyncpa [#allocation6], 0
    %18 = vsyncpa [#allocation9], 0
    %19 = vsyncpa [#allocation12], 0
    %20 = vsyncpa [#allocation4], 0
    // Predicated region
    $region2: #{cross_attention.1} parent=1 // pred_check
      _
    $region3: #{cross_attention.1} parent=1 // pred_check_branch
      %22 = sbr.rel (0) target = $region5
    $region4: #{cross_attention.1} parent=1 // pred_region
      %24 = vsyncadd [#allocation3], 0
      %s25 = sshll.u32 %s0, 4
      %s26 = int_to_ptr.hbm [resolvable:$true] %s25
      %s27 = sshll.u32 [#allocation2], 4
      %s28 = int_to_ptr.vmem [resolvable:$true] %s27
      %33 = dma.hbm_to_vmem [thread:$0]  %s26, 256, %s28, [#allocation3], 128, 128, 8
    $region5: #{cross_attention.1} parent=1 // pred_fallthru
      _
    // Predicated region
    $region6: #{cross_attention.1} parent=1 // pred_check
      _
    $region7: #{cross_attention.1} parent=1 // pred_check_branch
      %35 = sbr.rel (0) target = $region9
    $region8: #{cross_attention.1} parent=1 // pred_region
      %37 = vsyncadd [#allocation6], 0
      %s38 = sshll.u32 %s1, 4
      %s39 = int_to_ptr.hbm [resolvable:$true] %s38
      %s40 = sshll.u32 [#allocation5], 4
      %s41 = int_to_ptr.vmem [resolvable:$true] %s40
      %46 = dma.hbm_to_vmem [thread:$0]  %s39, 256, %s41, [#allocation6], 128, 128, 8
    $region9: #{cross_attention.1} parent=1 // pred_fallthru
      _
    // Predicated region
    $region10: #{cross_attention.1} parent=1 // pred_check
      _
    $region11: #{cross_attention.1} parent=1 // pred_check_branch
      %48 = sbr.rel (0) target = $region13
    $region12: #{cross_attention.1} parent=1 // pred_region
      %50 = vsyncadd [#allocation6], 0
      %s51 = sshll.u32 %s2, 4
      %s52 = int_to_ptr.hbm [resolvable:$true] %s51
      %s53 = sshll.u32 [#allocation7], 4
      %s54 = int_to_ptr.vmem [resolvable:$true] %s53
      %59 = dma.hbm_to_vmem [thread:$0]  %s52, 256, %s54, [#allocation6], 128, 128, 8
    $region13: #{cross_attention.1} parent=1 // pred_fallthru
      _
    // Predicated region
    $region14: #{cross_attention.1} parent=1 // pred_check
      _
    $region15: #{cross_attention.1} parent=1 // pred_check_branch
      %61 = sbr.rel (0) target = $region17
    $region16: #{cross_attention.1} parent=1 // pred_region
      %63 = vsyncadd [#allocation9], 0
      %s64 = sshll.u32 %s3, 4
      %s65 = int_to_ptr.hbm [resolvable:$true] %s64
      %s66 = sshll.u32 [#allocation8], 4
      %s67 = int_to_ptr.vmem [resolvable:$true] %s66
      %72 = dma.hbm_to_vmem [thread:$0]  %s65, 512, %s67, [#allocation9], 128, 128, 8
    $region17: #{cross_attention.1} parent=1 // pred_fallthru
      _
    // Predicated region
    $region18: #{cross_attention.1} parent=1 // pred_check
      _
    $region19: #{cross_attention.1} parent=1 // pred_check_branch
      %74 = sbr.rel (0) target = $region21
    $region20: #{cross_attention.1} parent=1 // pred_region
      _
    $region21: #{cross_attention.1} parent=1 // pred_fallthru
      _
    // Predicated region
    $region22: #{cross_attention.1} parent=1 // pred_check
      _
    $region23: #{cross_attention.1} parent=1 // pred_check_branch
      %76 = sbr.rel (0) target = $region25
    $region24: #{cross_attention.1} parent=1 // pred_region
      %78 = vsyncadd [#allocation9], 0
      %s79 = sshll.u32 %s5, 4
      %s80 = int_to_ptr.hbm [resolvable:$true] %s79
      %s81 = sshll.u32 [#allocation10], 4
      %s82 = int_to_ptr.vmem [resolvable:$true] %s81
      %87 = dma.hbm_to_vmem [thread:$0]  %s80, 1536, %s82, [#allocation9], 256, 256, 16
    $region25: #{cross_attention.1} parent=1 // pred_fallthru
      _
    // Predicated region
    $region26: #{cross_attention.1} parent=1 // pred_check
      _
    $region27: #{cross_attention.1} parent=1 // pred_check_branch
      %89 = sbr.rel (0) target = $region29
    $region28: #{cross_attention.1} parent=1 // pred_region
      _
    $region29: #{cross_attention.1} parent=1 // pred_fallthru
      _
    // Predicated region
    $region30: #{cross_attention.1} parent=1 // pred_check
      _
    $region31: #{cross_attention.1} parent=1 // pred_check_branch
      %91 = sbr.rel (0) target = $region33
    $region32: #{cross_attention.1} parent=1 // pred_region
      %93 = vsyncadd [#allocation12], 0
      %s94 = sshll.u32 %s7, 4
      %s95 = int_to_ptr.hbm [resolvable:$true] %s94
      %s96 = sshll.u32 [#allocation11], 4
      %s97 = int_to_ptr.vmem [resolvable:$true] %s96
      %102 = dma.hbm_to_vmem [thread:$0]  %s95, 2048, %s97, [#allocation12], 128, 128, 8
    $region33: #{cross_attention.1} parent=1 // pred_fallthru
      _
    // Predicated region
    $region34: #{cross_attention.1} parent=1 // pred_check
      _
    $region35: #{cross_attention.1} parent=1 // pred_check_branch
      %104 = sbr.rel (0) target = $region37
    $region36: #{cross_attention.1} parent=1 // pred_region
      %106 = vsyncadd [#allocation12], 0
      %s108 = sshll.u32 %s8, 4
      %s109 = int_to_ptr.hbm [resolvable:$true] %s108
      %s110 = sshll.u32 [#allocation13], 4
      %s111 = int_to_ptr.vmem [resolvable:$true] %s110
      %113 = dma.hbm_to_vmem [thread:$0]  %s109, 16, %s111, [#allocation12]
    $region37: #{cross_attention.1} parent=1 // pred_fallthru
      _
    // Predicated region
    $region38: #{cross_attention.1} parent=1 // pred_check
      _
    $region39: #{cross_attention.1} parent=1 // pred_check_branch
      %115 = sbr.rel (0) target = $region41
    $region40: #{cross_attention.1} parent=1 // pred_region
      %117 = dma.done [#allocation3], 256
    $region41: #{cross_attention.1} parent=1 // pred_fallthru
      _
    // Predicated region
    $region42: #{cross_attention.1} parent=1 // pred_check
      _
    $region43: #{cross_attention.1} parent=1 // pred_check_branch
      %119 = sbr.rel (0) target = $region45
    $region44: #{cross_attention.1} parent=1 // pred_region
      %121 = dma.done [#allocation6], 256
    $region45: #{cross_attention.1} parent=1 // pred_fallthru
      _
    // Predicated region
    $region46: #{cross_attention.1} parent=1 // pred_check
      _
    $region47: #{cross_attention.1} parent=1 // pred_check_branch
      %123 = sbr.rel (0) target = $region49
    $region48: #{cross_attention.1} parent=1 // pred_region
      %125 = dma.done [#allocation6], 256
    $region49: #{cross_attention.1} parent=1 // pred_fallthru
      _
    // Predicated region
    $region50: #{cross_attention.1} parent=1 // pred_check
      _
    $region51: #{cross_attention.1} parent=1 // pred_check_branch
      %127 = sbr.rel (0) target = $region53
    $region52: #{cross_attention.1} parent=1 // pred_region
      %129 = dma.done [#allocation9], 512
    $region53: #{cross_attention.1} parent=1 // pred_fallthru
      _
    // Predicated region
    $region54: #{cross_attention.1} parent=1 // pred_check
      _
    $region55: #{cross_attention.1} parent=1 // pred_check_branch
      %131 = sbr.rel (0) target = $region57
    $region56: #{cross_attention.1} parent=1 // pred_region
      %133 = dma.done [#allocation9], 1536
    $region57: #{cross_attention.1} parent=1 // pred_fallthru
      _
    // Predicated region
    $region58: #{cross_attention.1} parent=1 // pred_check
      _
    $region59: #{cross_attention.1} parent=1 // pred_check_branch
      %135 = sbr.rel (0) target = $region61
    $region60: #{cross_attention.1} parent=1 // pred_region
      %137 = dma.done [#allocation12], 2048
    $region61: #{cross_attention.1} parent=1 // pred_fallthru
      _
    // Predicated region
    $region62: #{cross_attention.1} parent=1 // pred_check
      _
    $region63: #{cross_attention.1} parent=1 // pred_check_branch
      %139 = sbr.rel (0) target = $region65
    $region64: #{cross_attention.1} parent=1 // pred_region
      %141 = dma.done [#allocation12], 16
    $region65: #{cross_attention.1} parent=1 // pred_fallthru
      _
    %v142 = vld [vmem:[#allocation2] sm:$0xff]
    %v143 = vld [vmem:[#allocation2 + $0x8] sm:$0xff]
    %v144 = vld [vmem:[#allocation8] sm:$0xff]
    %v145 = vld [vmem:[#allocation8 + $0x8] sm:$0xff]
    %v146 = vld [vmem:[#allocation8 + $0x10] sm:$0xff]
    %v147 = vld [vmem:[#allocation8 + $0x18] sm:$0xff]
    %v148 = vld [vmem:[%s4] sm:$0x1]
    %v150 = vperm.slane %v148, 0
    %vm152 = vcmask 261120
    %v154 = vsel %vm152, %v142, 0
    %v157 = vsel %vm152, %v143, 0
    %159 = vmatpush.msra.mxu0 0.0
    %160 = vmatpush.msra.mxu0 0.0
    %161 = vmatpush.msra.mxu0 0.0
    %162 = vmatpush.msra.mxu0 0.0
    %163 = vmatpush.msra.mxu0 0.0
    %164 = vmatpush.msra.mxu0 0.0
    %165 = vmatpush.msra.mxu0 0.0
    %166 = vmatpush.msra.mxu0 0.0
    %167 = vmatpush.msra.mxu0 0.0
    %168 = vmatpush.msra.mxu0 0.0
    %169 = vmatpush.msra.mxu0 0.0
    %170 = vmatpush.msra.mxu0 0.0
    %171 = vmatpush.msra.mxu0 %v147
    %172 = vmatpush.msra.mxu0 %v146
    %173 = vmatpush.msra.mxu0 %v145
    %174 = vmatpush.msra.mxu0 %v144
    %175 = vmatmul.f32.gmra.mxu0 %v154
    %v176 = vpop.f32.mrf.mxu0
    %v177 = vadd.f32 %v150, %v176
    %178 = vmatmul.f32.gmra.mxu0 %v157
    %v179 = vpop.f32.mrf.mxu0
    %v180 = vadd.f32 %v150, %v179
    %181 = vdwg.mxu0
    %v182 = vld [vmem:[#allocation5] sm:$0xff]
    %v183 = vld [vmem:[#allocation5 + $0x8] sm:$0xff]
    %v184 = vld [vmem:[#allocation10] sm:$0xff]
    %v185 = vld [vmem:[#allocation10 + $0x8] sm:$0xff]
    %v186 = vld [vmem:[#allocation10 + $0x10] sm:$0xff]
    %v187 = vld [vmem:[#allocation10 + $0x18] sm:$0xff]
    %v188 = vld [vmem:[#allocation10 + $0x20] sm:$0xff]
    %v189 = vld [vmem:[#allocation10 + $0x28] sm:$0xff]
    %v190 = vld [vmem:[#allocation10 + $0x30] sm:$0xff]
    %v191 = vld [vmem:[#allocation10 + $0x38] sm:$0xff]
    %v192 = vld [vmem:[#allocation10 + $0x40] sm:$0xff]
    %v193 = vld [vmem:[#allocation10 + $0x48] sm:$0xff]
    %v194 = vld [vmem:[#allocation10 + $0x50] sm:$0xff]
    %v195 = vld [vmem:[#allocation10 + $0x58] sm:$0xff]
    %v196 = vld [vmem:[%s6] sm:$0x3]
    %v198 = vperm.slane %v196, 0
    %v199 = vperm.slane %v196, 1
    %vm202 = vcmask 392192
    %v204 = vsel %vm202, %v182, 0
    %v207 = vsel %vm202, %v183, 0
    %209 = vmatpush.msra.mxu0 0.0
    %210 = vmatpush.msra.mxu0 0.0
    %211 = vmatpush.msra.mxu0 0.0
    %212 = vmatpush.msra.mxu0 0.0
    %213 = vmatpush.msra.mxu0 0.0
    %214 = vmatpush.msra.mxu0 0.0
    %215 = vmatpush.msra.mxu0 0.0
    %216 = vmatpush.msra.mxu0 0.0
    %217 = vmatpush.msra.mxu0 0.0
    %218 = vmatpush.msra.mxu0 0.0
    %219 = vmatpush.msra.mxu0 %v194
    %220 = vmatpush.msra.mxu0 %v192
    %221 = vmatpush.msra.mxu0 %v190
    %222 = vmatpush.msra.mxu0 %v188
    %223 = vmatpush.msra.mxu0 %v186
    %224 = vmatpush.msra.mxu0 %v184
    %225 = vmatmul.f32.gmra.mxu0 %v204
    %v226 = vpop.f32.mrf.mxu0
    %v227 = vadd.f32 %v198, %v226
    %228 = vmatmul.f32.gmra.mxu0 %v207
    %v229 = vpop.f32.mrf.mxu0
    %v230 = vadd.f32 %v198, %v229
    %231 = vdwg.mxu0
    %232 = vmatpush.msra.mxu0 0.0
    %233 = vmatpush.msra.mxu0 0.0
    %234 = vmatpush.msra.mxu0 0.0
    %235 = vmatpush.msra.mxu0 0.0
    %236 = vmatpush.msra.mxu0 0.0
    %237 = vmatpush.msra.mxu0 0.0
    %238 = vmatpush.msra.mxu0 0.0
    %239 = vmatpush.msra.mxu0 0.0
    %240 = vmatpush.msra.mxu0 0.0
    %241 = vmatpush.msra.mxu0 0.0
    %242 = vmatpush.msra.mxu0 %v195
    %243 = vmatpush.msra.mxu0 %v193
    %244 = vmatpush.msra.mxu0 %v191
    %245 = vmatpush.msra.mxu0 %v189
    %246 = vmatpush.msra.mxu0 %v187
    %247 = vmatpush.msra.mxu0 %v185
    %248 = vmatmul.f32.gmra.mxu0 %v204
    %v249 = vpop.f32.mrf.mxu0
    %v250 = vadd.f32 %v199, %v249
    %251 = vmatmul.f32.gmra.mxu0 %v207
    %v252 = vpop.f32.mrf.mxu0
    %v253 = vadd.f32 %v199, %v252
    %254 = vdwg.mxu0
    %255 = vmatpush.xpose.msra.mxu0 0.0
    %256 = vmatpush.xpose.msra.mxu0 0.0
    %257 = vmatpush.xpose.msra.mxu0 0.0
    %258 = vmatpush.xpose.msra.mxu0 0.0
    %259 = vmatpush.xpose.msra.mxu0 0.0
    %260 = vmatpush.xpose.msra.mxu0 0.0
    %261 = vmatpush.xpose.msra.mxu0 0.0
    %262 = vmatpush.xpose.msra.mxu0 0.0
    %263 = vmatpush.xpose.msra.mxu0 0.0
    %264 = vmatpush.xpose.msra.mxu0 0.0
    %265 = vmatpush.xpose.msra.mxu0 0.0
    %266 = vmatpush.xpose.msra.mxu0 0.0
    %267 = vmatpush.xpose.msra.mxu0 0.0
    %268 = vmatpush.xpose.msra.mxu0 0.0
    %269 = vmatpush.xpose.msra.mxu0 %v230
    %270 = vmatpush.xpose.msra.mxu0 %v227
    %271 = vmatmul.f32.gmra.mxu0 %v177
    %v272 = vpop.f32.mrf.mxu0
    %v273 = vadd.f32 0.0, %v272
    %274 = vmatmul.f32.gmra.mxu0 %v180
    %v275 = vpop.f32.mrf.mxu0
    %v276 = vadd.f32 0.0, %v275
    %277 = vdwg.mxu0
    %vm278 = vcmask 130048
    %279 = vst.msk [vmem:[%s10] sm:$0xff] %vm278, %v273
    %280 = vst.msk [vmem:[%s10 + $0x8] sm:$0xff] %vm278, %v276
    %v281 = vld [vmem:[#allocation7] sm:$0xff]
    %v282 = vld [vmem:[#allocation7 + $0x8] sm:$0xff]
    %v283 = vadd.f32 %v273, %v281
    %v284 = vadd.f32 %v276, %v282
    %v285 = vsel %vm278, %v283, -inf
    %286 = vmax.xlane.f32.xlu0 %v285
    %v287 = vpop.xlane.xlu0 %286
    %v288 = vsel %vm278, %v284, -inf
    %289 = vmax.xlane.f32.xlu0 %v288
    %v290 = vpop.xlane.xlu0 %289
    %v291 = vsub.f32 %v283, %v287
    %v292 = vsub.f32 %v284, %v290
    %v293 = vmul.f32 %v291, 1.442695
    %v294 = vpow.pop %v293
    %v295 = vmul.f32 %v292, 1.442695
    %v296 = vpow.pop %v295
    %v297 = vsel %vm278, %v294, 0.0
    %298 = vadd.xlane.f32.xlu0 %v297
    %v299 = vpop.xlane.xlu0 %298
    %v300 = vsel %vm278, %v296, 0.0
    %301 = vadd.xlane.f32.xlu0 %v300
    %v302 = vpop.xlane.xlu0 %301
    %v303 = vrcp.pop %v299
    %v304 = vmul.f32 %v299, %v303
    %v305 = vsub.f32 1.0, %v304
    %v306 = vmul.f32 %v303, %v305
    %v307 = vadd.f32 %v303, %v306
    %vm308 = vweird.f32 %v299
    %vm309 = vweird.f32 %v303
    %vm310 = vmor %vm308, %vm309
    %v311 = vsel %vm310, %v303, %v307
    %v312 = vand.u32 2147483647, %v299
    %vm313 = vcmp.eq.f32.partialorder %v312, 8.507059e+37
    %v314 = vand.u32 %v299, 2147483648
    %v315 = vor.u32 1.1754944e-38, %v314
    %v316 = vsel %vm313, %v315, %v311
    %v317 = vmul.f32 %v294, %v316
    %v318 = vrcp.pop %v302
    %v319 = vmul.f32 %v302, %v318
    %v320 = vsub.f32 1.0, %v319
    %v321 = vmul.f32 %v318, %v320
    %v322 = vadd.f32 %v318, %v321
    %vm323 = vweird.f32 %v302
    %vm324 = vweird.f32 %v318
    %vm325 = vmor %vm323, %vm324
    %v326 = vsel %vm325, %v318, %v322
    %v327 = vand.u32 2147483647, %v302
    %vm328 = vcmp.eq.f32.partialorder %v327, 8.507059e+37
    %v329 = vand.u32 %v302, 2147483648
    %v330 = vor.u32 1.1754944e-38, %v329
    %v331 = vsel %vm328, %v330, %v326
    %v332 = vmul.f32 %v296, %v331
    %v334 = vsel %vm278, %v317, 0
    %v337 = vsel %vm278, %v332, 0
    %339 = vmatpush.msra.mxu0 0.0
    %340 = vmatpush.msra.mxu0 0.0
    %341 = vmatpush.msra.mxu0 0.0
    %342 = vmatpush.msra.mxu0 0.0
    %343 = vmatpush.msra.mxu0 0.0
    %344 = vmatpush.msra.mxu0 0.0
    %345 = vmatpush.msra.mxu0 0.0
    %346 = vmatpush.msra.mxu0 0.0
    %347 = vmatpush.msra.mxu0 0.0
    %348 = vmatpush.msra.mxu0 0.0
    %349 = vmatpush.msra.mxu0 0.0
    %350 = vmatpush.msra.mxu0 0.0
    %351 = vmatpush.msra.mxu0 0.0
    %352 = vmatpush.msra.mxu0 0.0
    %353 = vmatpush.msra.mxu0 %v253
    %354 = vmatpush.msra.mxu0 %v250
    %355 = vmatmul.f32.gmra.mxu0 %v334
    %v356 = vpop.f32.mrf.mxu0
    %v357 = vadd.f32 0.0, %v356
    %358 = vmatmul.f32.gmra.mxu0 %v337
    %v359 = vpop.f32.mrf.mxu0
    %v360 = vadd.f32 0.0, %v359
    %361 = vdwg.mxu0
    %v362 = vld [vmem:[#allocation11] sm:$0xff]
    %v363 = vld [vmem:[#allocation11 + $0x8] sm:$0xff]
    %v364 = vld [vmem:[#allocation11 + $0x10] sm:$0xff]
    %v365 = vld [vmem:[#allocation11 + $0x18] sm:$0xff]
    %v366 = vld [vmem:[#allocation11 + $0x20] sm:$0xff]
    %v367 = vld [vmem:[#allocation11 + $0x28] sm:$0xff]
    %v368 = vld [vmem:[#allocation11 + $0x30] sm:$0xff]
    %v369 = vld [vmem:[#allocation11 + $0x38] sm:$0xff]
    %v370 = vld [vmem:[#allocation11 + $0x40] sm:$0xff]
    %v371 = vld [vmem:[#allocation11 + $0x48] sm:$0xff]
    %v372 = vld [vmem:[#allocation11 + $0x50] sm:$0xff]
    %v373 = vld [vmem:[#allocation11 + $0x58] sm:$0xff]
    %v374 = vld [vmem:[#allocation11 + $0x60] sm:$0xff]
    %v375 = vld [vmem:[#allocation11 + $0x68] sm:$0xff]
    %v376 = vld [vmem:[#allocation11 + $0x70] sm:$0xff]
    %v377 = vld [vmem:[#allocation11 + $0x78] sm:$0xff]
    %v378 = vld [vmem:[#allocation13] sm:$0x1]
    %v380 = vperm.slane %v378, 0
    %382 = vmatpush.msra.mxu0 %v377
    %383 = vmatpush.msra.mxu0 %v376
    %384 = vmatpush.msra.mxu0 %v375
    %385 = vmatpush.msra.mxu0 %v374
    %386 = vmatpush.msra.mxu0 %v373
    %387 = vmatpush.msra.mxu0 %v372
    %388 = vmatpush.msra.mxu0 %v371
    %389 = vmatpush.msra.mxu0 %v370
    %390 = vmatpush.msra.mxu0 %v369
    %391 = vmatpush.msra.mxu0 %v368
    %392 = vmatpush.msra.mxu0 %v367
    %393 = vmatpush.msra.mxu0 %v366
    %394 = vmatpush.msra.mxu0 %v365
    %395 = vmatpush.msra.mxu0 %v364
    %396 = vmatpush.msra.mxu0 %v363
    %397 = vmatpush.msra.mxu0 %v362
    %398 = vmatmul.f32.gmra.mxu0 %v357
    %v399 = vpop.f32.mrf.mxu0
    %v400 = vadd.f32 %v380, %v399
    %401 = vmatmul.f32.gmra.mxu0 %v360
    %v402 = vpop.f32.mrf.mxu0
    %v403 = vadd.f32 %v380, %v402
    %404 = vdwg.mxu0
    %405 = vst [vmem:[#allocation14] sm:$0xff] %v400
    %406 = vst [vmem:[#allocation14 + $0x8] sm:$0xff] %v403
    // Predicated region
    $region66: #{cross_attention.1} parent=1 // pred_check
      _
    $region67: #{cross_attention.1} parent=1 // pred_check_branch
      %408 = sbr.rel (0) target = $region69
    $region68: #{cross_attention.1} parent=1 // pred_region
      %410 = vsyncadd [#allocation4], 0
      %s411 = sshll.u32 [#allocation14], 4
      %s412 = int_to_ptr.vmem [resolvable:$true] %s411
      %s413 = sshll.u32 %s9, 4
      %s414 = int_to_ptr.hbm [resolvable:$true] %s413
      %419 = dma.vmem_to_hbm [thread:$0]  %s412, 256, %s414, [#allocation4], 128, 128, 8
    $region69: #{cross_attention.1} parent=1 // pred_fallthru
      _
    // Predicated region
    $region70: #{cross_attention.1} parent=1 // pred_check
      _
    $region71: #{cross_attention.1} parent=1 // pred_check_branch
      %421 = sbr.rel (0) target = $region73
    $region72: #{cross_attention.1} parent=1 // pred_region
      _
    $region73: #{cross_attention.1} parent=1 // pred_fallthru
      _
    // Predicated region
    $region74: #{cross_attention.1} parent=1 // pred_check
      _
    $region75: #{cross_attention.1} parent=1 // pred_check_branch
      %423 = sbr.rel (0) target = $region77
    $region76: #{cross_attention.1} parent=1 // pred_region
      %425 = dma.done [#allocation4], 256
    $region77: #{cross_attention.1} parent=1 // pred_fallthru
      _
    // Predicated region
    $region78: #{cross_attention.1} parent=1 // pred_check
      _
    $region79: #{cross_attention.1} parent=1 // pred_check_branch
      %427 = sbr.rel (0) target = $region81
    $region80: #{cross_attention.1} parent=1 // pred_region
      _
    $region81: #{cross_attention.1} parent=1 // pred_fallthru
      _
    %428 = vsyncpa [#allocation3], 1
    %429 = vsyncpa [#allocation6], 1
    %430 = vsyncpa [#allocation9], 1
    %431 = vsyncpa [#allocation12], 1
    %432 = vsyncpa [#allocation4], 1

</llo_original>
